<compile_context>
chip_gen: v6e
topology: v6e:2x2x1
jax: 0.10.0
libtpu: 0.0.40
codegen_flags: <defaults>
</compile_context>

<pallas_src>
import jax
import jax.numpy as jnp
from jax.experimental import pallas as pl
from jax.experimental.pallas import tpu as pltpu


def _round_up(x, m):
    return ((x + m - 1) // m) * m


def _min_sublane(dtype):
    # Second-to-last-dim tiling granularity: 8 rows (32-bit), 16 (16-bit), 32 (8-bit).
    return max(8, 32 // jnp.dtype(dtype).itemsize)


def _vmem_capacity_bytes():
    try:
        return int(pltpu.get_tpu_info().vmem_capacity_bytes)
    except Exception:
        return 64 << 20   # conservative fallback (v7x per-TensorCore capacity)


def _lora_kernel(x_ref, wdT_ref, wuT_ref, o_ref):
    # x_ref:   (TM, K)   input rows in their ORIGINAL dtype; cast happens here.
    # wdT_ref: (K, R)    down.weight.T   (pre-transposed once, grid-invariant)
    # wuT_ref: (R, TN)   up.weight.T     (pre-transposed + lane-padded once)
    # o_ref:   (TM, TN)  output tile in the original input dtype.
    w_dtype = wdT_ref.dtype
    x = x_ref[...].astype(w_dtype)

    # h = x @ down.weight.T -> (TM, R), f32 accumulation on the MXU.
    h = jnp.dot(x, wdT_ref[...], preferred_element_type=jnp.float32)

    # y = h @ up.weight.T -> (TM, TN); compute in the weight dtype (PyTorch
    # semantics), f32 accumulation.
    y = jnp.dot(h.astype(w_dtype), wuT_ref[...], preferred_element_type=jnp.float32)

    o_ref[...] = y.astype(o_ref.dtype)


def prepare_lora_params(down_w, up_w):
    """One-time weight prep (call at parameter-load time and cache the result).

    down_w: (rank, in_features)   PyTorch layout
    up_w:   (out_features, rank)  PyTorch layout
    Returns (down_wT, up_wT_padded, out_features):
      down_wT: (in_features, rank)
      up_wT:   (rank, round_up(out_features, 128))  zero-padded, lane-dense.
    """
    out_features = up_w.shape[0]
    n_pad = _round_up(out_features, 128)
    down_wT = jnp.asarray(down_w).T                 # (K, R)
    up_wT = jnp.asarray(up_w).T                     # (R, N)
    if n_pad != out_features:
        up_wT = jnp.pad(up_wT, ((0, 0), (0, n_pad - out_features)))
    return down_wT, up_wT, out_features


def lora_linear_prepared(x, down_wT, up_wT, out_features, *, tm=None, tn=None):
    """LoRA forward with pre-prepared weights (see prepare_lora_params)."""
    orig_dtype = x.dtype
    w_dtype = down_wT.dtype

    lead_shape = x.shape[:-1]
    in_features = x.shape[-1]
    rank = down_wT.shape[1]
    n_pad = up_wT.shape[1]

    x2d = x.reshape(-1, in_features)          # NO wrapper cast / pad of x
    M = x2d.shape[0]

    x_bytes = jnp.dtype(orig_dtype).itemsize
    w_bytes = jnp.dtype(w_dtype).itemsize
    sublane = max(_min_sublane(orig_dtype), _min_sublane(w_dtype))

    # --- tile selection from the actual VMEM capacity --------------------------
    cap = _vmem_capacity_bytes()
    budget = max(cap - (16 << 20), 8 << 20)   # headroom for Mosaic internal scratch

    def vmem_need(tm_, tn_):
        stream = 2 * tm_ * (in_features + tn_) * x_bytes            # dbl-buffered x / out tiles
        weights = 2 * (in_features * rank + rank * tn_) * w_bytes   # grid-invariant (DMAed once)
        interm = tm_ * (in_features * w_bytes                       # x cast copy
                        + rank * (4 + w_bytes)                      # f32 h + cast
                        + tn_ * 4)                                  # f32 y accumulator
        return stream + weights + interm

    if tn is None:
        tn = min(n_pad, 2048)
    tn = max(128, _round_up(min(tn, n_pad), 128))

    if tm is None:
        tm = 1024                              # largest tile that fits the budget
        while tm > sublane and vmem_need(tm, tn) > budget:
            tm //= 2
        while tn > 128 and vmem_need(max(tm, sublane), tn) > budget:
            tn = max(128, _round_up(tn // 2, 128))
    tm = max(sublane, min(_round_up(tm, sublane), _round_up(M, sublane)))

    grid_m = pl.cdiv(M, tm)
    grid_n = pl.cdiv(n_pad, tn)
    # v7x megacore: give the two TensorCores >= 2 grid points when N allows it.
    if grid_m * grid_n < 2 and n_pad >= 256:
        tn = max(128, _round_up(pl.cdiv(n_pad, 2), 128))
        grid_n = pl.cdiv(n_pad, tn)

    vmem_limit = int(min(cap - (8 << 20),
                         max(vmem_need(tm, tn) + (4 << 20), 32 << 20)))

    cost = pl.CostEstimate(
        flops=2 * M * in_features * rank * grid_n + 2 * M * rank * n_pad,
        transcendentals=0,
        bytes_accessed=(M * in_features * x_bytes
                        + M * n_pad * x_bytes
                        + (in_features * rank + rank * n_pad) * w_bytes))

    out2d = pl.pallas_call(
        _lora_kernel,
        out_shape=jax.ShapeDtypeStruct((M, n_pad), orig_dtype),
        grid_spec=pltpu.PrefetchScalarGridSpec(
            num_scalar_prefetch=0,
            grid=(grid_m, grid_n),
            in_specs=[
                # x block index is constant along j (innermost) -> fetched once per row-tile.
                pl.BlockSpec((tm, in_features), lambda i, j: (i, 0)),
                pl.BlockSpec((in_features, rank), lambda i, j: (0, 0)),
                pl.BlockSpec((rank, tn), lambda i, j: (0, j)),
            ],
            out_specs=pl.BlockSpec((tm, tn), lambda i, j: (i, j)),
        ),
        compiler_params=pltpu.CompilerParams(
            dimension_semantics=("parallel", "parallel"),
            vmem_limit_bytes=vmem_limit),
        cost_estimate=cost,
    )(x2d, down_wT, up_wT)

    if n_pad != out_features:
        # Only taken when out_features is not already a multiple of 128.
        out2d = out2d[:, :out_features]
    return out2d.reshape(*lead_shape, out_features)


def lora_linear(x, down_w, up_w, *, tm=None, tn=None):
    """Convenience wrapper taking PyTorch-layout weights.

    For repeated forward passes, call prepare_lora_params() once and reuse
    lora_linear_prepared() so the transpose/pad is not redone per call.
    """
    down_wT, up_wT, out_features = prepare_lora_params(down_w, up_w)
    return lora_linear_prepared(x, down_wT, up_wT, out_features, tm=tm, tn=tn)


def _ref_forward(x, down_w, up_w):
    # Pure-JAX reference of the PyTorch forward.
    w_dtype = down_w.dtype
    y = (x.astype(w_dtype) @ down_w.T) @ up_w.T
    return y.astype(x.dtype)


if __name__ == "__main__":
    # Small shapes: batch=2, seq=8, in_features=32, out_features=32, rank=4
    batch, seq = 2, 8
    in_features, out_features, rank = 32, 32, 4

    key = jax.random.PRNGKey(0)
    kx, kd, ku, kx2 = jax.random.split(key, 4)

    x = jax.random.normal(kx, (batch, seq, in_features), dtype=jnp.float32)

    # Deterministic init matching nn.Module __init__:
    #   down.weight ~ Normal(std=1/rank), shape (rank, in_features)
    #   up.weight   = zeros,              shape (out_features, rank)
    down_w = (1.0 / rank) * jax.random.normal(
        kd, (rank, in_features), dtype=jnp.float32)
    up_w = jnp.zeros((out_features, rank), dtype=jnp.float32)

    # 1) Spec init (up == 0) -> output must be exactly zero.
    out = jax.block_until_ready(lora_linear(x, down_w, up_w))
    ref = _ref_forward(x, down_w, up_w)
    assert out.shape == (batch, seq, out_features)
    assert out.dtype == x.dtype
    assert jnp.allclose(out, ref, atol=1e-5, rtol=1e-5)

    # 2) Non-trivial up weights, via the prepared (cached-weight) path.
    up_w2 = jax.random.normal(ku, (out_features, rank), dtype=jnp.float32)
    params2 = prepare_lora_params(down_w, up_w2)
    out2 = jax.block_until_ready(lora_linear_prepared(x, *params2))
    ref2 = _ref_forward(x, down_w, up_w2)
    assert jnp.allclose(out2, ref2, atol=1e-4, rtol=1e-4)

    # 3) Ragged M (batch*seq not a multiple of the row-tile granularity):
    #    exercised via the masked edge block, no x padding / output row slice.
    x3 = jax.random.normal(kx2, (3, 7, in_features), dtype=jnp.float32)
    out3 = jax.block_until_ready(lora_linear_prepared(x3, *params2))
    ref3 = _ref_forward(x3, down_w, up_w2)
    assert out3.shape == (3, 7, out_features)
    assert jnp.allclose(out3, ref3, atol=1e-4, rtol=1e-4)

    print("KERNEL_OK")
</pallas_src>

<mosaic_0001>
module attributes {stable_mosaic.version = 11 : i64} {
  func.func @_lora_kernel(%arg0: i32, %arg1: i32, %arg2: memref<16x32xf32, #tpu.memory_space<vmem>>, %arg3: memref<32x4xf32, #tpu.memory_space<vmem>>, %arg4: memref<4x128xf32, #tpu.memory_space<vmem>>, %arg5: memref<16x128xf32, #tpu.memory_space<vmem>>) attributes {dimension_semantics = [#tpu.dimension_semantics<parallel>, #tpu.dimension_semantics<parallel>], iteration_bounds = array<i64: 1, 1>, scalar_prefetch = 0 : i64, scratch_operands = 0 : i64, tpu.core_type = #tpu.core_type<tc>, window_params = [{transform_indices = @transform_0, window_bounds = array<i64: 16, 32>}, {pipeline_mode = #tpu.pipeline_mode<synchronous>, transform_indices = @transform_1, window_bounds = array<i64: 32, 4>}, {transform_indices = @transform_2, window_bounds = array<i64: 4, 128>}, {transform_indices = @transform_3, window_bounds = array<i64: 16, 128>}]} {
    %c0 = arith.constant 0 : index
    %c0_0 = arith.constant 0 : index
    %0 = vector.load %arg2[%c0, %c0_0] : memref<16x32xf32, #tpu.memory_space<vmem>>, vector<16x32xf32>
    %c0_1 = arith.constant 0 : index
    %c0_2 = arith.constant 0 : index
    %1 = vector.load %arg3[%c0_1, %c0_2] : memref<32x4xf32, #tpu.memory_space<vmem>>, vector<32x4xf32>
    %cst = arith.constant dense<0.000000e+00> : vector<16x4xf32>
    %2 = tpu.matmul %0, %1, %cst {dimension_numbers = #tpu.dot_dimension_numbers<[1], [0], [0], [1], [0, 0, 1, 1], [], []>} : vector<16x32xf32>, vector<32x4xf32>, vector<16x4xf32> -> vector<16x4xf32>
    %c0_3 = arith.constant 0 : index
    %c0_4 = arith.constant 0 : index
    %3 = vector.load %arg4[%c0_3, %c0_4] : memref<4x128xf32, #tpu.memory_space<vmem>>, vector<4x128xf32>
    %cst_5 = arith.constant dense<0.000000e+00> : vector<16x128xf32>
    %4 = tpu.matmul %2, %3, %cst_5 {dimension_numbers = #tpu.dot_dimension_numbers<[1], [0], [0], [1], [0, 0, 1, 1], [], []>} : vector<16x4xf32>, vector<4x128xf32>, vector<16x128xf32> -> vector<16x128xf32>
    %c0_6 = arith.constant 0 : index
    %c0_7 = arith.constant 0 : index
    %5 = vector.load %arg5[%c0_6, %c0_7] : memref<16x128xf32, #tpu.memory_space<vmem>>, vector<16x128xf32>
    tpu.vector_store %arg5[%c0_6, %c0_7], %4 {strides = array<i32>} : memref<16x128xf32, #tpu.memory_space<vmem>>, vector<16x128xf32>,
    return
  }
  func.func @transform_0(%arg0: i32, %arg1: i32) -> (i32, i32) {
    %c0_i32 = arith.constant 0 : i32
    %c0_i32_0 = arith.constant 0 : i32
    return %arg0, %c0_i32 : i32, i32
  }
  func.func @transform_1(%arg0: i32, %arg1: i32) -> (i32, i32) {
    %c0_i32 = arith.constant 0 : i32
    %c0_i32_0 = arith.constant 0 : i32
    %c0_i32_1 = arith.constant 0 : i32
    return %c0_i32, %c0_i32_0 : i32, i32
  }
  func.func @transform_2(%arg0: i32, %arg1: i32) -> (i32, i32) {
    %c0_i32 = arith.constant 0 : i32
    %c0_i32_0 = arith.constant 0 : i32
    return %c0_i32, %arg1 : i32, i32
  }
  func.func @transform_3(%arg0: i32, %arg1: i32) -> (i32, i32) {
    %c0_i32 = arith.constant 0 : i32
    return %arg0, %arg1 : i32, i32
  }
}

</mosaic_0001>

<llo_original>
// kernel: tpu_custom_call.1
$region0: #{tpu_custom_call.1}
  #allocation0 [shape = 'u32[]', space=smem, size = 0x4, offset = 0x4, fixed_abs, tag = 'smem constant byte address 0x4 - core index']
  #allocation1 [shape = 'u32[144,128]{1,0:T(1,128)}', space=vmem, size = 0x12000, scoped, tag = 'internal scratch']
  %s0 = inlined_call_operand.vmem [shape: f32[16,32], index: 0, kind: input, shape index: {}]
  %s1 = inlined_call_operand.vmem [shape: f32[32,4], index: 1, kind: input, shape index: {}]
  %s2 = inlined_call_operand.vmem [shape: f32[4,128], index: 2, kind: input, shape index: {}]
  %s3 = inlined_call_operand.hbm [shape: f32[16,128], index: 3, kind: output, shape index: {}]
  %s4 = sld [smem:[#allocation0]]
  $region22: #{tpu_custom_call.1} parent=0
    _
  %s6 = ssub.s32 1, %s4
  %s7 = scalar_select 0, %s6, %s4
  $region1: #{tpu_custom_call.1} parent=0
    #allocation2 [shape = 'u8[8192]{0}', space=vmem, size = 0x2000, scoped, tag = 'output window, operand 0, single buffered']
    #allocation3 [shape = 's32[1]{0}', space=sflag, size = 0x4, scoped, tag = 'scoped memory for tpu_custom_call.1']
    %8 = vsyncpa [#allocation3], 0
    // Predicated region
    $region2: #{tpu_custom_call.1} parent=1 // pred_check
      _
    $region3: #{tpu_custom_call.1} parent=1 // pred_check_branch
      %10 = sbr.rel (0) target = $region5
    $region4: #{tpu_custom_call.1} parent=1 // pred_region
      _
    $region5: #{tpu_custom_call.1} parent=1 // pred_fallthru
      _
    // Predicated region
    $region6: #{tpu_custom_call.1} parent=1 // pred_check
      _
    $region7: #{tpu_custom_call.1} parent=1 // pred_check_branch
      %12 = sbr.rel (0) target = $region9
    $region8: #{tpu_custom_call.1} parent=1 // pred_region
      _
    $region9: #{tpu_custom_call.1} parent=1 // pred_fallthru
      _
    // Predicated region
    $region10: #{tpu_custom_call.1} parent=1 // pred_check
      _
    $region11: #{tpu_custom_call.1} parent=1 // pred_check_branch
      %14 = sbr.rel (0) target = $region13
    $region12: #{tpu_custom_call.1} parent=1 // pred_region
      _
    $region13: #{tpu_custom_call.1} parent=1 // pred_fallthru
      _
    %v15 = vld [vmem:[%s0] sm:$0xff]
    %v16 = vld [vmem:[%s0 + $0x8] sm:$0xff]
    %v17 = vld [vmem:[%s1] sm:$0xff]
    %v18 = vld [vmem:[%s1 + $0x8] sm:$0xff]
    %v19 = vld [vmem:[%s1 + $0x10] sm:$0xff]
    %v20 = vld [vmem:[%s1 + $0x18] sm:$0xff]
    %vm21 = vcmask 261120
    %v23 = vsel %vm21, %v15, 0
    %v26 = vsel %vm21, %v16, 0
    %28 = vmatprep.subr.mxu0 0.0
    %29 = vmatpush1.msra.mxu0 0.0
    %30 = vmatprep.subr.mxu0 0.0
    %31 = vmatpush1.msra.mxu0 0.0
    %32 = vmatprep.subr.mxu0 0.0
    %33 = vmatpush1.msra.mxu0 0.0
    %34 = vmatprep.subr.mxu0 0.0
    %35 = vmatpush1.msra.mxu0 0.0
    %36 = vmatprep.subr.mxu0 0.0
    %37 = vmatpush1.msra.mxu0 0.0
    %38 = vmatprep.subr.mxu0 0.0
    %39 = vmatpush1.msra.mxu0 0.0
    %40 = vmatprep.subr.mxu0 0.0
    %41 = vmatpush1.msra.mxu0 0.0
    %42 = vmatprep.subr.mxu0 0.0
    %43 = vmatpush1.msra.mxu0 0.0
    %44 = vmatprep.subr.mxu0 0.0
    %45 = vmatpush1.msra.mxu0 0.0
    %46 = vmatprep.subr.mxu0 0.0
    %47 = vmatpush1.msra.mxu0 0.0
    %48 = vmatprep.subr.mxu0 0.0
    %49 = vmatpush1.msra.mxu0 0.0
    %50 = vmatprep.subr.mxu0 0.0
    %51 = vmatpush1.msra.mxu0 0.0
    %52 = vmatprep.subr.mxu0 0.0
    %53 = vmatpush1.msra.mxu0 %v20
    %54 = vmatprep.subr.mxu0 0.0
    %55 = vmatpush1.msra.mxu0 %v19
    %56 = vmatprep.subr.mxu0 0.0
    %57 = vmatpush1.msra.mxu0 %v18
    %58 = vmatprep.subr.mxu0 0.0
    %59 = vmatpush1.msra.mxu0 %v17
    %60 = vmatprep.subr.mxu0 0.0
    %61 = vmatpush2.msra.mxu0 0.0
    %62 = vmatprep.subr.mxu0 0.0
    %63 = vmatpush2.msra.mxu0 0.0
    %64 = vmatprep.subr.mxu0 0.0
    %65 = vmatpush2.msra.mxu0 0.0
    %66 = vmatprep.subr.mxu0 0.0
    %67 = vmatpush2.msra.mxu0 0.0
    %68 = vmatprep.subr.mxu0 0.0
    %69 = vmatpush2.msra.mxu0 0.0
    %70 = vmatprep.subr.mxu0 0.0
    %71 = vmatpush2.msra.mxu0 0.0
    %72 = vmatprep.subr.mxu0 0.0
    %73 = vmatpush2.msra.mxu0 0.0
    %74 = vmatprep.subr.mxu0 0.0
    %75 = vmatpush2.msra.mxu0 0.0
    %76 = vmatprep.subr.mxu0 0.0
    %77 = vmatpush2.msra.mxu0 0.0
    %78 = vmatprep.subr.mxu0 0.0
    %79 = vmatpush2.msra.mxu0 0.0
    %80 = vmatprep.subr.mxu0 0.0
    %81 = vmatpush2.msra.mxu0 0.0
    %82 = vmatprep.subr.mxu0 0.0
    %83 = vmatpush2.msra.mxu0 0.0
    %84 = vmatprep.subr.mxu0 0.0
    %85 = vmatpush2.msra.mxu0 0.0
    %86 = vmatprep.subr.mxu0 0.0
    %87 = vmatpush2.msra.mxu0 0.0
    %88 = vmatprep.subr.mxu0 0.0
    %89 = vmatpush2.msra.mxu0 0.0
    %90 = vmatprep.subr.mxu0 0.0
    %91 = vmatpush2.msra.mxu0 0.0
    %92 = vmatprep.mubr.f32.mxu0 0.0
    %93 = vmatmul.mubr.f32.gmra.mxu0 %v23
    %v94 = vpop.f32.mrf.mxu0
    %v95 = vadd.f32 0.0, %v94
    %v96 = vpop.f32.mrf.mxu0
    %97 = vmatprep.mubr.f32.mxu0 0.0
    %98 = vmatmul.mubr.f32.gmra.mxu0 %v26
    %v99 = vpop.f32.mrf.mxu0
    %v100 = vadd.f32 0.0, %v99
    %v101 = vpop.f32.mrf.mxu0
    %102 = vdwg.mxu0
    %v103 = vld [vmem:[%s2] sm:$0xf]
    %vm104 = vcmask 31744
    %v106 = vsel %vm104, %v95, 0
    %v109 = vsel %vm104, %v100, 0
    %vm111 = vcmask 1043456
    %v113 = vsel %vm111, %v103, 0
    %115 = vmatprep.subr.mxu0 0.0
    %116 = vmatpush1.msra.mxu0 0.0
    %117 = vmatprep.subr.mxu0 0.0
    %118 = vmatpush1.msra.mxu0 0.0
    %119 = vmatprep.subr.mxu0 0.0
    %120 = vmatpush1.msra.mxu0 0.0
    %121 = vmatprep.subr.mxu0 0.0
    %122 = vmatpush1.msra.mxu0 0.0
    %123 = vmatprep.subr.mxu0 0.0
    %124 = vmatpush1.msra.mxu0 0.0
    %125 = vmatprep.subr.mxu0 0.0
    %126 = vmatpush1.msra.mxu0 0.0
    %127 = vmatprep.subr.mxu0 0.0
    %128 = vmatpush1.msra.mxu0 0.0
    %129 = vmatprep.subr.mxu0 0.0
    %130 = vmatpush1.msra.mxu0 0.0
    %131 = vmatprep.subr.mxu0 0.0
    %132 = vmatpush1.msra.mxu0 0.0
    %133 = vmatprep.subr.mxu0 0.0
    %134 = vmatpush1.msra.mxu0 0.0
    %135 = vmatprep.subr.mxu0 0.0
    %136 = vmatpush1.msra.mxu0 0.0
    %137 = vmatprep.subr.mxu0 0.0
    %138 = vmatpush1.msra.mxu0 0.0
    %139 = vmatprep.subr.mxu0 0.0
    %140 = vmatpush1.msra.mxu0 0.0
    %141 = vmatprep.subr.mxu0 0.0
    %142 = vmatpush1.msra.mxu0 0.0
    %143 = vmatprep.subr.mxu0 0.0
    %144 = vmatpush1.msra.mxu0 0.0
    %145 = vmatprep.subr.mxu0 0.0
    %146 = vmatpush1.msra.mxu0 %v113
    %147 = vmatprep.subr.mxu0 0.0
    %148 = vmatpush2.msra.mxu0 0.0
    %149 = vmatprep.subr.mxu0 0.0
    %150 = vmatpush2.msra.mxu0 0.0
    %151 = vmatprep.subr.mxu0 0.0
    %152 = vmatpush2.msra.mxu0 0.0
    %153 = vmatprep.subr.mxu0 0.0
    %154 = vmatpush2.msra.mxu0 0.0
    %155 = vmatprep.subr.mxu0 0.0
    %156 = vmatpush2.msra.mxu0 0.0
    %157 = vmatprep.subr.mxu0 0.0
    %158 = vmatpush2.msra.mxu0 0.0
    %159 = vmatprep.subr.mxu0 0.0
    %160 = vmatpush2.msra.mxu0 0.0
    %161 = vmatprep.subr.mxu0 0.0
    %162 = vmatpush2.msra.mxu0 0.0
    %163 = vmatprep.subr.mxu0 0.0
    %164 = vmatpush2.msra.mxu0 0.0
    %165 = vmatprep.subr.mxu0 0.0
    %166 = vmatpush2.msra.mxu0 0.0
    %167 = vmatprep.subr.mxu0 0.0
    %168 = vmatpush2.msra.mxu0 0.0
    %169 = vmatprep.subr.mxu0 0.0
    %170 = vmatpush2.msra.mxu0 0.0
    %171 = vmatprep.subr.mxu0 0.0
    %172 = vmatpush2.msra.mxu0 0.0
    %173 = vmatprep.subr.mxu0 0.0
    %174 = vmatpush2.msra.mxu0 0.0
    %175 = vmatprep.subr.mxu0 0.0
    %176 = vmatpush2.msra.mxu0 0.0
    %177 = vmatprep.subr.mxu0 0.0
    %178 = vmatpush2.msra.mxu0 0.0
    %179 = vmatprep.mubr.f32.mxu0 0.0
    %180 = vmatmul.mubr.f32.gmra.mxu0 %v106
    %v181 = vpop.f32.mrf.mxu0
    %v182 = vadd.f32 0.0, %v181
    %v183 = vpop.f32.mrf.mxu0
    %184 = vmatprep.mubr.f32.mxu0 0.0
    %185 = vmatmul.mubr.f32.gmra.mxu0 %v109
    %v186 = vpop.f32.mrf.mxu0
    %v187 = vadd.f32 0.0, %v186
    %v188 = vpop.f32.mrf.mxu0
    %189 = vdwg.mxu0
    %190 = vst [vmem:[#allocation2] sm:$0xff] %v182
    %191 = vst [vmem:[#allocation2 + $0x8] sm:$0xff] %v187
    // Predicated region
    $region14: #{tpu_custom_call.1} parent=1 // pred_check
      _
    $region15: #{tpu_custom_call.1} parent=1 // pred_check_branch
      %193 = sbr.rel (0) target = $region17
    $region16: #{tpu_custom_call.1} parent=1 // pred_region
      %s195 = ssub.s32 256, 256
      %196 = vsyncadd [#allocation3], %s195
      %s197 = sshll.u32 [#allocation2], 4
      %s198 = int_to_ptr.vmem [resolvable:$true] %s197
      %203 = dma.vmem_to_hbm [thread:$0]  %s198, 256, %s3, [#allocation3], 128, 128, 8
    $region17: #{tpu_custom_call.1} parent=1 // pred_fallthru
      _
    // Predicated region
    $region18: #{tpu_custom_call.1} parent=1 // pred_check
      _
    $region19: #{tpu_custom_call.1} parent=1 // pred_check_branch
      %205 = sbr.rel (0) target = $region21
    $region20: #{tpu_custom_call.1} parent=1 // pred_region
      %206 = dma.done [#allocation3], 256
    $region21: #{tpu_custom_call.1} parent=1 // pred_fallthru
      _
    %207 = vsyncpa [#allocation3], 1

</llo_original>
